<compile_context>
chip_gen: v5e
topology: v5e:2x2
jax: 0.10.0
libtpu: 0.0.40
codegen_flags: <defaults>
</compile_context>

<pallas_src>
import jax
import jax.numpy as jnp
from jax.experimental import pallas as pl
from jax.experimental.pallas import tpu as pltpu

BF16 = jnp.bfloat16
F32 = jnp.float32

LANE = 128
SUBLANE = 8

# Exact (erf) GELU matches torch nn.GELU(); tanh approximation is cheaper on
# TPU (EUP slot, otherwise idle) and is the default per the perf review.
EXACT_GELU = False

# Under the identity stand-in for the frozen LM, the landmark embedding never
# reaches the regressor input, so its MLP is dead code. Flip on once the real
# LM forward is implemented.
COMPUTE_LANDMARK_EMBED = False


def _round_up(x, m):
    return (x + m - 1) // m * m


def _cdiv(a, b):
    return (a + b - 1) // b


def _gelu(x):
    return jax.nn.gelu(x, approximate=not EXACT_GELU)


# ----------------------------------------------------------------------------
# Kernel bodies. Weights are VMEM-resident (single-buffered), activation rows
# streamed per batch tile; matmuls accumulate in f32 on the MXU, bf16 between
# layers (matches the torch.bfloat16 module).
# ----------------------------------------------------------------------------
def _linear(x, w_ref, b_ref):
    y = jnp.dot(x, w_ref[...], preferred_element_type=F32)
    return y + b_ref[...].astype(F32)


def regressor_kernel(x_ref, rw1_ref, rb1_ref, rw2_ref, rb2_ref,
                     rw3_ref, rb3_ref, rw4_ref, rb4_ref, out_ref):
    # emotion regressor: E -> 2048 -> 1024 -> 512 -> Np (lane-padded)
    h = _gelu(_linear(x_ref[...], rw1_ref, rb1_ref)).astype(BF16)
    h = _gelu(_linear(h, rw2_ref, rb2_ref)).astype(BF16)
    h = _gelu(_linear(h, rw3_ref, rb3_ref)).astype(BF16)
    out_ref[...] = _linear(h, rw4_ref, rb4_ref).astype(BF16)


def landmark_mlp_kernel(x_ref, lw1_ref, lb1_ref, lw2_ref, lb2_ref, out_ref):
    # landmark embedding ('mlp' variant assumed Linear -> GELU -> Linear)
    h = _gelu(_linear(x_ref[...], lw1_ref, lb1_ref)).astype(BF16)
    out_ref[...] = _linear(h, lw2_ref, lb2_ref).astype(BF16)


# ----------------------------------------------------------------------------
# Tiling / spec helpers
# ----------------------------------------------------------------------------
def _batch_tiling(B, max_tile=512):
    """<=512-row tiles; padding per block is at most SUBLANE-1 rows."""
    n_blocks = max(1, _cdiv(B, max_tile))
    tb = _round_up(_cdiv(B, n_blocks), SUBLANE)
    return tb, tb * n_blocks, n_blocks


def _row_spec(tb, d):
    return pl.BlockSpec((tb, d), lambda i: (i, 0))


def _resident_spec(a):
    # Constant index_map: the block is fetched once and never changes, so a
    # single pipeline buffer suffices (double-buffering it only wastes VMEM).
    try:
        return pl.BlockSpec(a.shape, lambda i: (0, 0),
                            pipeline_mode=pl.Buffered(1))
    except TypeError:  # older jax without pipeline_mode on BlockSpec
        return pl.BlockSpec(a.shape, lambda i: (0, 0))


def _dim_semantics(n_blocks):
    # v7x has 2 TensorCores; sharding the batch axis duplicates the ~6 MiB
    # weight DMA into each core — only worth it with enough blocks to amortize.
    return ("parallel",) if n_blocks >= 4 else ("arbitrary",)


def _vmem_limit(weight_bytes, tb, dims):
    # single-buffered weights + f32 intermediates / in-out blocks + headroom
    return int(weight_bytes + 4 * tb * sum(dims) + (16 << 20))


# ----------------------------------------------------------------------------
# pallas_call wrappers
# ----------------------------------------------------------------------------
def emotion_regressor(x, rw1, rb1, rw2, rb2, rw3, rb3, rw4, rb4):
    """x: (B, E) bf16 -> (B, Np) bf16 (Np = lane-padded output width)."""
    B, E = x.shape
    H1, H2, H3, Np = rw1.shape[1], rw2.shape[1], rw3.shape[1], rw4.shape[1]

    tb, Bp, n_blocks = _batch_tiling(B)
    if Bp != B:
        x = jnp.pad(x, ((0, Bp - B), (0, 0)))

    weights = (rw1, rb1, rw2, rb2, rw3, rb3, rw4, rb4)
    weight_bytes = sum(int(w.size) * w.dtype.itemsize for w in weights)
    cost = pl.CostEstimate(
        flops=2 * Bp * (E * H1 + H1 * H2 + H2 * H3 + H3 * Np),
        transcendentals=Bp * (H1 + H2 + H3),
        bytes_accessed=weight_bytes + 2 * Bp * (E + Np),
    )

    out = pl.pallas_call(
        regressor_kernel,
        out_shape=jax.ShapeDtypeStruct((Bp, Np), BF16),
        grid=(n_blocks,),
        in_specs=[_row_spec(tb, E)] + [_resident_spec(w) for w in weights],
        out_specs=_row_spec(tb, Np),
        compiler_params=pltpu.CompilerParams(
            dimension_semantics=_dim_semantics(n_blocks),
            vmem_limit_bytes=_vmem_limit(weight_bytes, tb, (E, H1, H2, H3, Np)),
        ),
        cost_estimate=cost,
    )(x, *weights)
    return out[:B]


def landmark_mlp(x, lw1, lb1, lw2, lb2):
    """x: (B, Kp) bf16 lane-padded flattened landmarks -> (B, E) bf16."""
    B, Kp = x.shape
    E = lw2.shape[1]

    tb, Bp, n_blocks = _batch_tiling(B)
    if Bp != B:
        x = jnp.pad(x, ((0, Bp - B), (0, 0)))

    weights = (lw1, lb1, lw2, lb2)
    weight_bytes = sum(int(w.size) * w.dtype.itemsize for w in weights)
    cost = pl.CostEstimate(
        flops=2 * Bp * (Kp * E + E * E),
        transcendentals=Bp * E,
        bytes_accessed=weight_bytes + 2 * Bp * (Kp + E),
    )

    out = pl.pallas_call(
        landmark_mlp_kernel,
        out_shape=jax.ShapeDtypeStruct((Bp, E), BF16),
        grid=(n_blocks,),
        in_specs=[_row_spec(tb, Kp)] + [_resident_spec(w) for w in weights],
        out_specs=_row_spec(tb, E),
        compiler_params=pltpu.CompilerParams(
            dimension_semantics=_dim_semantics(n_blocks),
            vmem_limit_bytes=_vmem_limit(weight_bytes, tb, (Kp, E, E)),
        ),
        cost_estimate=cost,
    )(x, *weights)
    return out[:B]


# ----------------------------------------------------------------------------
# Full forward (mirrors CustomModelWithPrefix.forward)
# ----------------------------------------------------------------------------
def forward(input_ids, attention_mask, landmarks, params):
    B = input_ids.shape[0]

    # inputs_embeds = lm.get_input_embeddings()(input_ids)          (B, S, E)
    inputs_embeds = jnp.take(params["tok_emb"], input_ids, axis=0)

    if COMPUTE_LANDMARK_EMBED:
        # landmark_embed = self.landmark_embedding(landmarks)       (B, 1, E)
        lm_flat = landmarks.reshape(B, -1).astype(BF16)
        Kp = params["lw1"].shape[0]
        lm_flat = jnp.pad(lm_flat, ((0, 0), (0, Kp - lm_flat.shape[1])))
        landmark_embed = landmark_mlp(lm_flat, params["lw1"], params["lb1"],
                                      params["lw2"], params["lb2"])
        inputs_embeds = jnp.concatenate(
            [landmark_embed[:, None, :], inputs_embeds], axis=1)
        landmarks_attention = jnp.ones((attention_mask.shape[0], 1),
                                       dtype=attention_mask.dtype)
        attention_mask = jnp.concatenate(
            [landmarks_attention, attention_mask], axis=1)
    # else: under the identity-LM stand-in the prepended landmark token never
    # reaches position -1, so the landmark MLP output (and the extended mask)
    # is dead — skipped (perf review item 7).

    # TODO(synk): frozen pretrained causal LM forward is untranslatable without
    # its checkpoint; stand-in: hidden_states[-1] := inputs_embeds (identity).
    sequence_output = inputs_embeds
    last_tok = sequence_output[:, -1, :].astype(BF16)

    reg_out = emotion_regressor(
        last_tok,
        params["rw1"], params["rb1"], params["rw2"], params["rb2"],
        params["rw3"], params["rb3"], params["rw4p"], params["rb4p"])

    # final layer stored lane-padded to 128 -> slice the 6 real outputs.
    return reg_out[:, :6]


# ----------------------------------------------------------------------------
# Deterministic parameter init (weights stored pre-padded for lane alignment)
# ----------------------------------------------------------------------------
def init_params(key, *, n_landmarks, embed_dim, vocab):
    ks = jax.random.split(key, 8)
    L3 = n_landmarks * 3
    Kp = _round_up(L3, LANE)          # 48 -> 128 zero-padded contraction dim
    OUT, OUTp = 6, LANE               # 6  -> 128 zero-padded output dim

    def w(k, shape, scale=0.02):
        return (jax.random.normal(k, shape, dtype=F32) * scale).astype(BF16)

    lw1 = jnp.zeros((Kp, embed_dim), BF16).at[:L3].set(w(ks[0], (L3, embed_dim)))
    rw4p = jnp.zeros((512, OUTp), BF16).at[:, :OUT].set(w(ks[6], (512, OUT)))

    return {
        # landmark embedding MLP: (K-padded) L3 -> E -> E
        "lw1": lw1,
        "lb1": jnp.zeros((1, embed_dim), BF16),
        "lw2": w(ks[1], (embed_dim, embed_dim)),
        "lb2": jnp.zeros((1, embed_dim), BF16),
        # token embedding table
        "tok_emb": w(ks[2], (vocab, embed_dim)),
        # emotion regressor: E -> 2048 -> 1024 -> 512 -> (N-padded) 6
        "rw1": w(ks[3], (embed_dim, 2048)),
        "rb1": jnp.zeros((1, 2048), BF16),
        "rw2": w(ks[4], (2048, 1024)),
        "rb2": jnp.zeros((1, 1024), BF16),
        "rw3": w(ks[5], (1024, 512)),
        "rb3": jnp.zeros((1, 512), BF16),
        "rw4p": rw4p,
        "rb4p": jnp.zeros((1, OUTp), BF16),
    }


if __name__ == "__main__":
    B, S = 2, 8
    N_LANDMARKS = 16          # -> 48 raw features for the landmark MLP
    EMBED_DIM = 256           # stand-in for lm.config.hidden_size
    VOCAB = 128

    key = jax.random.PRNGKey(0)
    kp, k_ids, k_lm = jax.random.split(key, 3)

    params = init_params(kp, n_landmarks=N_LANDMARKS, embed_dim=EMBED_DIM,
                         vocab=VOCAB)

    input_ids = jax.random.randint(k_ids, (B, S), 0, VOCAB, dtype=jnp.int32)
    attention_mask = jnp.ones((B, S), dtype=jnp.float32)
    landmarks = jax.random.normal(k_lm, (B, N_LANDMARKS, 3), dtype=F32)

    # smoke-test the (currently dead-in-forward) landmark MLP kernel as well,
    # since it is part of the module's semantics once the real LM is wired in.
    lm_flat = landmarks.reshape(B, -1).astype(BF16)
    lm_flat = jnp.pad(lm_flat,
                      ((0, 0), (0, params["lw1"].shape[0] - lm_flat.shape[1])))
    lm_embed = landmark_mlp(lm_flat, params["lw1"], params["lb1"],
                            params["lw2"], params["lb2"])
    jax.block_until_ready(lm_embed)
    assert lm_embed.shape == (B, EMBED_DIM) and lm_embed.dtype == BF16

    out = forward(input_ids, attention_mask, landmarks, params)
    jax.block_until_ready(out)
    assert out.shape == (B, 6) and out.dtype == BF16
    print("KERNEL_OK")
</pallas_src>

<mosaic_0001>
module attributes {stable_mosaic.version = 11 : i64} {
  func.func @landmark_mlp_kernel(%arg0: i32, %arg1: memref<8x128xbf16, #tpu.memory_space<vmem>>, %arg2: memref<128x256xbf16, #tpu.memory_space<vmem>>, %arg3: memref<1x256xbf16, #tpu.memory_space<vmem>>, %arg4: memref<256x256xbf16, #tpu.memory_space<vmem>>, %arg5: memref<1x256xbf16, #tpu.memory_space<vmem>>, %arg6: memref<8x256xbf16, #tpu.memory_space<vmem>>) attributes {dimension_semantics = [#tpu.dimension_semantics<arbitrary>], iteration_bounds = array<i64: 1>, scalar_prefetch = 0 : i64, scratch_operands = 0 : i64, tpu.core_type = #tpu.core_type<tc>, window_params = [{transform_indices = @transform_0, window_bounds = array<i64: 8, 128>}, {pipeline_mode = #tpu.pipeline_mode<synchronous>, transform_indices = @transform_1, window_bounds = array<i64: 128, 256>}, {pipeline_mode = #tpu.pipeline_mode<synchronous>, transform_indices = @transform_2, window_bounds = array<i64: 1, 256>}, {pipeline_mode = #tpu.pipeline_mode<synchronous>, transform_indices = @transform_3, window_bounds = array<i64: 256, 256>}, {pipeline_mode = #tpu.pipeline_mode<synchronous>, transform_indices = @transform_4, window_bounds = array<i64: 1, 256>}, {transform_indices = @transform_5, window_bounds = array<i64: 8, 256>}]} {
    %c0 = arith.constant 0 : index
    %c0_0 = arith.constant 0 : index
    %0 = vector.load %arg1[%c0, %c0_0] : memref<8x128xbf16, #tpu.memory_space<vmem>>, vector<8x128xbf16>
    %c0_1 = arith.constant 0 : index
    %c0_2 = arith.constant 0 : index
    %1 = vector.load %arg2[%c0_1, %c0_2] : memref<128x256xbf16, #tpu.memory_space<vmem>>, vector<128x256xbf16>
    %cst = arith.constant dense<0.000000e+00> : vector<8x256xf32>
    %2 = tpu.matmul %0, %1, %cst {dimension_numbers = #tpu.dot_dimension_numbers<[1], [0], [0], [1], [0, 0, 1, 1], [], []>} : vector<8x128xbf16>, vector<128x256xbf16>, vector<8x256xf32> -> vector<8x256xf32>
    %c0_3 = arith.constant 0 : index
    %c0_4 = arith.constant 0 : index
    %3 = vector.load %arg3[%c0_3, %c0_4] : memref<1x256xbf16, #tpu.memory_space<vmem>>, vector<1x256xbf16>
    %4 = arith.extf %3 : vector<1x256xbf16> to vector<1x256xf32>
    %5 = vector.broadcast %4 : vector<1x256xf32> to vector<8x256xf32>
    %6 = arith.addf %2, %5 : vector<8x256xf32>
    %7 = arith.mulf %6, %6 : vector<8x256xf32>
    %8 = arith.mulf %6, %7 : vector<8x256xf32>
    %cst_5 = arith.constant 4.471500e-02 : f32
    %9 = vector.broadcast %cst_5 : f32 to vector<8x256xf32>
    %10 = arith.mulf %9, %8 : vector<8x256xf32>
    %11 = arith.addf %6, %10 : vector<8x256xf32>
    %cst_6 = arith.constant 0.797884583 : f32
    %12 = vector.broadcast %cst_6 : f32 to vector<8x256xf32>
    %13 = arith.mulf %12, %11 : vector<8x256xf32>
    %14 = math.tanh %13 : vector<8x256xf32>
    %cst_7 = arith.constant 1.000000e+00 : f32
    %15 = vector.broadcast %cst_7 : f32 to vector<8x256xf32>
    %16 = arith.addf %15, %14 : vector<8x256xf32>
    %cst_8 = arith.constant 5.000000e-01 : f32
    %17 = vector.broadcast %cst_8 : f32 to vector<8x256xf32>
    %18 = arith.mulf %17, %16 : vector<8x256xf32>
    %19 = arith.mulf %6, %18 : vector<8x256xf32>
    %20 = arith.truncf %19 : vector<8x256xf32> to vector<8x256xbf16>
    %c0_9 = arith.constant 0 : index
    %c0_10 = arith.constant 0 : index
    %21 = vector.load %arg4[%c0_9, %c0_10] : memref<256x256xbf16, #tpu.memory_space<vmem>>, vector<256x256xbf16>
    %cst_11 = arith.constant dense<0.000000e+00> : vector<8x256xf32>
    %22 = tpu.matmul %20, %21, %cst_11 {dimension_numbers = #tpu.dot_dimension_numbers<[1], [0], [0], [1], [0, 0, 1, 1], [], []>} : vector<8x256xbf16>, vector<256x256xbf16>, vector<8x256xf32> -> vector<8x256xf32>
    %c0_12 = arith.constant 0 : index
    %c0_13 = arith.constant 0 : index
    %23 = vector.load %arg5[%c0_12, %c0_13] : memref<1x256xbf16, #tpu.memory_space<vmem>>, vector<1x256xbf16>
    %24 = arith.extf %23 : vector<1x256xbf16> to vector<1x256xf32>
    %25 = vector.broadcast %24 : vector<1x256xf32> to vector<8x256xf32>
    %26 = arith.addf %22, %25 : vector<8x256xf32>
    %27 = arith.truncf %26 : vector<8x256xf32> to vector<8x256xbf16>
    %c0_14 = arith.constant 0 : index
    %c0_15 = arith.constant 0 : index
    %28 = vector.load %arg6[%c0_14, %c0_15] : memref<8x256xbf16, #tpu.memory_space<vmem>>, vector<8x256xbf16>
    tpu.vector_store %arg6[%c0_14, %c0_15], %27 {strides = array<i32>} : memref<8x256xbf16, #tpu.memory_space<vmem>>, vector<8x256xbf16>,
    return
  }
  func.func @transform_0(%arg0: i32) -> (i32, i32) {
    %c0_i32 = arith.constant 0 : i32
    %c0_i32_0 = arith.constant 0 : i32
    return %arg0, %c0_i32 : i32, i32
  }
  func.func @transform_1(%arg0: i32) -> (i32, i32) {
    %c0_i32 = arith.constant 0 : i32
    %c0_i32_0 = arith.constant 0 : i32
    %c0_i32_1 = arith.constant 0 : i32
    return %c0_i32, %c0_i32_0 : i32, i32
  }
  func.func @transform_2(%arg0: i32) -> (i32, i32) {
    %c0_i32 = arith.constant 0 : i32
    %c0_i32_0 = arith.constant 0 : i32
    %c0_i32_1 = arith.constant 0 : i32
    return %c0_i32, %c0_i32_0 : i32, i32
  }
  func.func @transform_3(%arg0: i32) -> (i32, i32) {
    %c0_i32 = arith.constant 0 : i32
    %c0_i32_0 = arith.constant 0 : i32
    %c0_i32_1 = arith.constant 0 : i32
    return %c0_i32, %c0_i32_0 : i32, i32
  }
  func.func @transform_4(%arg0: i32) -> (i32, i32) {
    %c0_i32 = arith.constant 0 : i32
    %c0_i32_0 = arith.constant 0 : i32
    %c0_i32_1 = arith.constant 0 : i32
    return %c0_i32, %c0_i32_0 : i32, i32
  }
  func.func @transform_5(%arg0: i32) -> (i32, i32) {
    %c0_i32 = arith.constant 0 : i32
    %c0_i32_0 = arith.constant 0 : i32
    return %arg0, %c0_i32 : i32, i32
  }
}

</mosaic_0001>

<llo_original>
// kernel: tpu_custom_call.1
$region0: #{tpu_custom_call.1}
  #allocation0 [shape = 'u32[]', space=smem, size = 0x4, offset = 0x4, fixed_abs, tag = 'smem constant byte address 0x4 - core index']
  #allocation1 [shape = 'u32[72,128]{1,0:T(1,128)}', space=vmem, size = 0x9000, scoped, tag = 'internal scratch']
  %s0 = inlined_call_operand.hbm [shape: bf16[8,128], index: 0, kind: input, shape index: {}]
  %s1 = inlined_call_operand.hbm [shape: bf16[128,256], index: 1, kind: input, shape index: {}]
  %s2 = inlined_call_operand.hbm [shape: bf16[1,256], index: 2, kind: input, shape index: {}]
  %s3 = inlined_call_operand.hbm [shape: bf16[256,256], index: 3, kind: input, shape index: {}]
  %s4 = inlined_call_operand.vmem [shape: bf16[1,256], index: 4, kind: input, shape index: {}]
  %s5 = inlined_call_operand.hbm [shape: bf16[8,256], index: 5, kind: output, shape index: {}]
  %s6 = sld [smem:[#allocation0]]
  $region46: #{tpu_custom_call.1} parent=0
    _
  %s8 = ssub.s32 1, %s6
  %s9 = scalar_select 0, %s8, %s6
  $region1: #{tpu_custom_call.1} parent=0
    #allocation2 [shape = 'u8[2048]{0}', space=vmem, size = 0x800, scoped, tag = 'input window, operand 0, single buffered']
    #allocation3 [shape = 's32[1]{0}', space=sflag, size = 0x4, scoped, tag = 'scoped memory for tpu_custom_call.1']
    #allocation4 [shape = 's32[1]{0}', space=sflag, size = 0x4, scoped, tag = 'scoped memory for tpu_custom_call.1']
    #allocation5 [shape = 'u8[65536]{0}', space=vmem, size = 0x10000, scoped, tag = 'input window, operand 1, single buffered']
    #allocation6 [shape = 's32[1]{0}', space=sflag, size = 0x4, scoped, tag = 'scoped memory for tpu_custom_call.1']
    #allocation7 [shape = 'u8[1024]{0}', space=vmem, size = 0x400, scoped, tag = 'input window, operand 2, single buffered']
    #allocation8 [shape = 'u8[131072]{0}', space=vmem, size = 0x20000, scoped, tag = 'input window, operand 3, single buffered']
    #allocation9 [shape = 's32[1]{0}', space=sflag, size = 0x4, scoped, tag = 'scoped memory for tpu_custom_call.1']
    #allocation10 [shape = 'u8[4096]{0}', space=vmem, size = 0x1000, scoped, tag = 'output window, operand 0, single buffered']
    %10 = vsyncpa [#allocation3], 0
    %11 = vsyncpa [#allocation6], 0
    %12 = vsyncpa [#allocation9], 0
    %13 = vsyncpa [#allocation4], 0
    // Predicated region
    $region2: #{tpu_custom_call.1} parent=1 // pred_check
      _
    $region3: #{tpu_custom_call.1} parent=1 // pred_check_branch
      %15 = sbr.rel (0) target = $region5
    $region4: #{tpu_custom_call.1} parent=1 // pred_region
      %17 = vsyncadd [#allocation3], 0
      %s19 = sshll.u32 %s0, 4
      %s20 = int_to_ptr.hbm [resolvable:$true] %s19
      %s21 = sshll.u32 [#allocation2], 4
      %s22 = int_to_ptr.vmem [resolvable:$true] %s21
      %24 = dma.hbm_to_vmem [thread:$0]  %s20, 64, %s22, [#allocation3]
    $region5: #{tpu_custom_call.1} parent=1 // pred_fallthru
      _
    // Predicated region
    $region6: #{tpu_custom_call.1} parent=1 // pred_check
      _
    $region7: #{tpu_custom_call.1} parent=1 // pred_check_branch
      %26 = sbr.rel (0) target = $region9
    $region8: #{tpu_custom_call.1} parent=1 // pred_region
      %28 = vsyncadd [#allocation6], 0
      %s29 = sshll.u32 %s1, 4
      %s30 = int_to_ptr.hbm [resolvable:$true] %s29
      %s31 = sshll.u32 [#allocation5], 4
      %s32 = int_to_ptr.vmem [resolvable:$true] %s31
      %37 = dma.hbm_to_vmem [thread:$0]  %s30, 2048, %s32, [#allocation6], 128, 128, 8
    $region9: #{tpu_custom_call.1} parent=1 // pred_fallthru
      _
    // Predicated region
    $region10: #{tpu_custom_call.1} parent=1 // pred_check
      _
    $region11: #{tpu_custom_call.1} parent=1 // pred_check_branch
      %39 = sbr.rel (0) target = $region13
    $region12: #{tpu_custom_call.1} parent=1 // pred_region
      %41 = vsyncadd [#allocation6], 0
      %s43 = sshll.u32 %s2, 4
      %s44 = int_to_ptr.hbm [resolvable:$true] %s43
      %s45 = sshll.u32 [#allocation7], 4
      %s46 = int_to_ptr.vmem [resolvable:$true] %s45
      %48 = dma.hbm_to_vmem [thread:$0]  %s44, 32, %s46, [#allocation6]
    $region13: #{tpu_custom_call.1} parent=1 // pred_fallthru
      _
    // Predicated region
    $region14: #{tpu_custom_call.1} parent=1 // pred_check
      _
    $region15: #{tpu_custom_call.1} parent=1 // pred_check_branch
      %50 = sbr.rel (0) target = $region17
    $region16: #{tpu_custom_call.1} parent=1 // pred_region
      %52 = vsyncadd [#allocation9], 0
      %s53 = sshll.u32 %s3, 4
      %s54 = int_to_ptr.hbm [resolvable:$true] %s53
      %s55 = sshll.u32 [#allocation8], 4
      %s56 = int_to_ptr.vmem [resolvable:$true] %s55
      %61 = dma.hbm_to_vmem [thread:$0]  %s54, 4096, %s56, [#allocation9], 128, 128, 8
    $region17: #{tpu_custom_call.1} parent=1 // pred_fallthru
      _
    // Predicated region
    $region18: #{tpu_custom_call.1} parent=1 // pred_check
      _
    $region19: #{tpu_custom_call.1} parent=1 // pred_check_branch
      %63 = sbr.rel (0) target = $region21
    $region20: #{tpu_custom_call.1} parent=1 // pred_region
      _
    $region21: #{tpu_custom_call.1} parent=1 // pred_fallthru
      _
    // Predicated region
    $region22: #{tpu_custom_call.1} parent=1 // pred_check
      _
    $region23: #{tpu_custom_call.1} parent=1 // pred_check_branch
      %65 = sbr.rel (0) target = $region25
    $region24: #{tpu_custom_call.1} parent=1 // pred_region
      %67 = dma.done [#allocation3], 64
    $region25: #{tpu_custom_call.1} parent=1 // pred_fallthru
      _
    // Predicated region
    $region26: #{tpu_custom_call.1} parent=1 // pred_check
      _
    $region27: #{tpu_custom_call.1} parent=1 // pred_check_branch
      %69 = sbr.rel (0) target = $region29
    $region28: #{tpu_custom_call.1} parent=1 // pred_region
      %71 = dma.done [#allocation6], 2048
    $region29: #{tpu_custom_call.1} parent=1 // pred_fallthru
      _
    // Predicated region
    $region30: #{tpu_custom_call.1} parent=1 // pred_check
      _
    $region31: #{tpu_custom_call.1} parent=1 // pred_check_branch
      %73 = sbr.rel (0) target = $region33
    $region32: #{tpu_custom_call.1} parent=1 // pred_region
      %75 = dma.done [#allocation6], 32
    $region33: #{tpu_custom_call.1} parent=1 // pred_fallthru
      _
    // Predicated region
    $region34: #{tpu_custom_call.1} parent=1 // pred_check
      _
    $region35: #{tpu_custom_call.1} parent=1 // pred_check_branch
      %77 = sbr.rel (0) target = $region37
    $region36: #{tpu_custom_call.1} parent=1 // pred_region
      %79 = dma.done [#allocation9], 4096
    $region37: #{tpu_custom_call.1} parent=1 // pred_fallthru
      _
    %v80 = vld [vmem:[#allocation2] sm:$0xf]
    %v81 = vld [vmem:[#allocation5] sm:$0xff]
    %v82 = vld [vmem:[#allocation5 + $0x8] sm:$0xff]
    %v83 = vld [vmem:[#allocation5 + $0x10] sm:$0xff]
    %v84 = vld [vmem:[#allocation5 + $0x18] sm:$0xff]
    %v85 = vld [vmem:[#allocation5 + $0x20] sm:$0xff]
    %v86 = vld [vmem:[#allocation5 + $0x28] sm:$0xff]
    %v87 = vld [vmem:[#allocation5 + $0x30] sm:$0xff]
    %v88 = vld [vmem:[#allocation5 + $0x38] sm:$0xff]
    %v89 = vld [vmem:[#allocation5 + $0x40] sm:$0xff]
    %v90 = vld [vmem:[#allocation5 + $0x48] sm:$0xff]
    %v91 = vld [vmem:[#allocation5 + $0x50] sm:$0xff]
    %v92 = vld [vmem:[#allocation5 + $0x58] sm:$0xff]
    %v93 = vld [vmem:[#allocation5 + $0x60] sm:$0xff]
    %v94 = vld [vmem:[#allocation5 + $0x68] sm:$0xff]
    %v95 = vld [vmem:[#allocation5 + $0x70] sm:$0xff]
    %v96 = vld [vmem:[#allocation5 + $0x78] sm:$0xff]
    %v97 = vld [vmem:[#allocation7] sm:$0x3]
    %v98 = vunpack.c.l.bf16 %v97
    %v100 = vperm.slane %v98, 0
    %v101 = vperm.slane %v98, 2
    %v104 = vperm.slane %v100, 0
    %v105 = vperm.slane %v101, 0
    %v122 = vunpack.c.l.b16 %v81
    %v123 = vunpack.c.h.b16 %v81
    %v124 = vunpack.c.l.b16 %v82
    %v125 = vunpack.c.h.b16 %v82
    %v126 = vunpack.c.l.b16 %v83
    %v127 = vunpack.c.h.b16 %v83
    %v128 = vunpack.c.l.b16 %v84
    %v129 = vunpack.c.h.b16 %v84
    %v130 = vunpack.c.l.b16 %v85
    %v131 = vunpack.c.h.b16 %v85
    %v132 = vunpack.c.l.b16 %v86
    %v133 = vunpack.c.h.b16 %v86
    %v134 = vunpack.c.l.b16 %v87
    %v135 = vunpack.c.h.b16 %v87
    %v136 = vunpack.c.l.b16 %v88
    %v137 = vunpack.c.h.b16 %v88
    %v138 = vunpack.c.l.b16 %v89
    %v139 = vunpack.c.h.b16 %v89
    %v140 = vunpack.c.l.b16 %v90
    %v141 = vunpack.c.h.b16 %v90
    %v142 = vunpack.c.l.b16 %v91
    %v143 = vunpack.c.h.b16 %v91
    %v144 = vunpack.c.l.b16 %v92
    %v145 = vunpack.c.h.b16 %v92
    %v146 = vunpack.c.l.b16 %v93
    %v147 = vunpack.c.h.b16 %v93
    %v148 = vunpack.c.l.b16 %v94
    %v149 = vunpack.c.h.b16 %v94
    %v150 = vunpack.c.l.b16 %v95
    %v151 = vunpack.c.h.b16 %v95
    %v152 = vunpack.c.l.b16 %v96
    %v153 = vunpack.c.h.b16 %v96
    %v154 = vpack.c.b16 %v124, %v122
    %v155 = vpack.c.b16 %v125, %v123
    %v156 = vpack.c.b16 %v128, %v126
    %v157 = vpack.c.b16 %v129, %v127
    %v158 = vpack.c.b16 %v132, %v130
    %v159 = vpack.c.b16 %v133, %v131
    %v160 = vpack.c.b16 %v136, %v134
    %v161 = vpack.c.b16 %v137, %v135
    %v162 = vpack.c.b16 %v140, %v138
    %v163 = vpack.c.b16 %v141, %v139
    %v164 = vpack.c.b16 %v144, %v142
    %v165 = vpack.c.b16 %v145, %v143
    %v166 = vpack.c.b16 %v148, %v146
    %v167 = vpack.c.b16 %v149, %v147
    %v168 = vpack.c.b16 %v152, %v150
    %v169 = vpack.c.b16 %v153, %v151
    %186 = vmatpush.bf16.msra.mxu0 %v168
    %187 = vmatpush.bf16.msra.mxu0 %v166
    %188 = vmatpush.bf16.msra.mxu0 %v164
    %189 = vmatpush.bf16.msra.mxu0 %v162
    %190 = vmatpush.bf16.msra.mxu0 %v160
    %191 = vmatpush.bf16.msra.mxu0 %v158
    %192 = vmatpush.bf16.msra.mxu0 %v156
    %193 = vmatpush.bf16.msra.mxu0 %v154
    %194 = vmatmul.bf16.gmra.mxu0 %v80
    %v195 = vpop.f32.mrf.mxu0
    %v196 = vadd.f32 %v104, %v195
    %v197 = vpop.f32.mrf.mxu0
    %198 = vdwg.mxu0
    %199 = vmatpush.bf16.msra.mxu0 %v169
    %200 = vmatpush.bf16.msra.mxu0 %v167
    %201 = vmatpush.bf16.msra.mxu0 %v165
    %202 = vmatpush.bf16.msra.mxu0 %v163
    %203 = vmatpush.bf16.msra.mxu0 %v161
    %204 = vmatpush.bf16.msra.mxu0 %v159
    %205 = vmatpush.bf16.msra.mxu0 %v157
    %206 = vmatpush.bf16.msra.mxu0 %v155
    %207 = vmatmul.bf16.gmra.mxu0 %v80
    %v208 = vpop.f32.mrf.mxu0
    %v209 = vadd.f32 %v105, %v208
    %v210 = vpop.f32.mrf.mxu0
    %211 = vdwg.mxu0
    %v212 = vmul.f32 %v196, %v196
    %v213 = vmul.f32 %v209, %v209
    %v214 = vmul.f32 %v196, %v212
    %v215 = vmul.f32 %v209, %v213
    %v216 = vmul.f32 %v214, 0.044715
    %v217 = vmul.f32 %v215, 0.044715
    %v218 = vadd.f32 %v196, %v216
    %v219 = vadd.f32 %v209, %v217
    %v220 = vmul.f32 %v218, 0.7978846
    %v221 = vmul.f32 %v219, 0.7978846
    %v222 = vtanh.pop %v220
    %v223 = vtanh.pop %v221
    %v224 = vadd.f32 %v222, 1.0
    %v225 = vadd.f32 %v223, 1.0
    %v226 = vmul.f32 %v224, 0.5
    %v227 = vmul.f32 %v225, 0.5
    %v228 = vmul.f32 %v196, %v226
    %v229 = vmul.f32 %v209, %v227
    %v230 = vpack.c.bf16 %v228, %v228
    %v231 = vpack.c.bf16 %v229, %v229
    %v232 = vld [vmem:[#allocation8] sm:$0xff]
    %v233 = vld [vmem:[#allocation8 + $0x8] sm:$0xff]
    %v234 = vld [vmem:[#allocation8 + $0x10] sm:$0xff]
    %v235 = vld [vmem:[#allocation8 + $0x18] sm:$0xff]
    %v236 = vld [vmem:[#allocation8 + $0x20] sm:$0xff]
    %v237 = vld [vmem:[#allocation8 + $0x28] sm:$0xff]
    %v238 = vld [vmem:[#allocation8 + $0x30] sm:$0xff]
    %v239 = vld [vmem:[#allocation8 + $0x38] sm:$0xff]
    %v240 = vld [vmem:[#allocation8 + $0x40] sm:$0xff]
    %v241 = vld [vmem:[#allocation8 + $0x48] sm:$0xff]
    %v242 = vld [vmem:[#allocation8 + $0x50] sm:$0xff]
    %v243 = vld [vmem:[#allocation8 + $0x58] sm:$0xff]
    %v244 = vld [vmem:[#allocation8 + $0x60] sm:$0xff]
    %v245 = vld [vmem:[#allocation8 + $0x68] sm:$0xff]
    %v246 = vld [vmem:[#allocation8 + $0x70] sm:$0xff]
    %v247 = vld [vmem:[#allocation8 + $0x78] sm:$0xff]
    %v248 = vld [vmem:[#allocation8 + $0x80] sm:$0xff]
    %v249 = vld [vmem:[#allocation8 + $0x88] sm:$0xff]
    %v250 = vld [vmem:[#allocation8 + $0x90] sm:$0xff]
    %v251 = vld [vmem:[#allocation8 + $0x98] sm:$0xff]
    %v252 = vld [vmem:[#allocation8 + $0xa0] sm:$0xff]
    %v253 = vld [vmem:[#allocation8 + $0xa8] sm:$0xff]
    %v254 = vld [vmem:[#allocation8 + $0xb0] sm:$0xff]
    %v255 = vld [vmem:[#allocation8 + $0xb8] sm:$0xff]
    %v256 = vld [vmem:[#allocation8 + $0xc0] sm:$0xff]
    %v257 = vld [vmem:[#allocation8 + $0xc8] sm:$0xff]
    %v258 = vld [vmem:[#allocation8 + $0xd0] sm:$0xff]
    %v259 = vld [vmem:[#allocation8 + $0xd8] sm:$0xff]
    %v260 = vld [vmem:[#allocation8 + $0xe0] sm:$0xff]
    %v261 = vld [vmem:[#allocation8 + $0xe8] sm:$0xff]
    %v262 = vld [vmem:[#allocation8 + $0xf0] sm:$0xff]
    %v263 = vld [vmem:[#allocation8 + $0xf8] sm:$0xff]
    %v264 = vld [vmem:[%s4] sm:$0x3]
    %v265 = vunpack.c.l.bf16 %v264
    %v267 = vperm.slane %v265, 0
    %v268 = vperm.slane %v265, 2
    %v271 = vperm.slane %v267, 0
    %v272 = vperm.slane %v268, 0
    %v305 = vunpack.c.l.b16 %v232
    %v306 = vunpack.c.h.b16 %v232
    %v307 = vunpack.c.l.b16 %v233
    %v308 = vunpack.c.h.b16 %v233
    %v309 = vunpack.c.l.b16 %v234
    %v310 = vunpack.c.h.b16 %v234
    %v311 = vunpack.c.l.b16 %v235
    %v312 = vunpack.c.h.b16 %v235
    %v313 = vunpack.c.l.b16 %v236
    %v314 = vunpack.c.h.b16 %v236
    %v315 = vunpack.c.l.b16 %v237
    %v316 = vunpack.c.h.b16 %v237
    %v317 = vunpack.c.l.b16 %v238
    %v318 = vunpack.c.h.b16 %v238
    %v319 = vunpack.c.l.b16 %v239
    %v320 = vunpack.c.h.b16 %v239
    %v321 = vunpack.c.l.b16 %v240
    %v322 = vunpack.c.h.b16 %v240
    %v323 = vunpack.c.l.b16 %v241
    %v324 = vunpack.c.h.b16 %v241
    %v325 = vunpack.c.l.b16 %v242
    %v326 = vunpack.c.h.b16 %v242
    %v327 = vunpack.c.l.b16 %v243
    %v328 = vunpack.c.h.b16 %v243
    %v329 = vunpack.c.l.b16 %v244
    %v330 = vunpack.c.h.b16 %v244
    %v331 = vunpack.c.l.b16 %v245
    %v332 = vunpack.c.h.b16 %v245
    %v333 = vunpack.c.l.b16 %v246
    %v334 = vunpack.c.h.b16 %v246
    %v335 = vunpack.c.l.b16 %v247
    %v336 = vunpack.c.h.b16 %v247
    %v337 = vunpack.c.l.b16 %v248
    %v338 = vunpack.c.h.b16 %v248
    %v339 = vunpack.c.l.b16 %v249
    %v340 = vunpack.c.h.b16 %v249
    %v341 = vunpack.c.l.b16 %v250
    %v342 = vunpack.c.h.b16 %v250
    %v343 = vunpack.c.l.b16 %v251
    %v344 = vunpack.c.h.b16 %v251
    %v345 = vunpack.c.l.b16 %v252
    %v346 = vunpack.c.h.b16 %v252
    %v347 = vunpack.c.l.b16 %v253
    %v348 = vunpack.c.h.b16 %v253
    %v349 = vunpack.c.l.b16 %v254
    %v350 = vunpack.c.h.b16 %v254
    %v351 = vunpack.c.l.b16 %v255
    %v352 = vunpack.c.h.b16 %v255
    %v353 = vunpack.c.l.b16 %v256
    %v354 = vunpack.c.h.b16 %v256
    %v355 = vunpack.c.l.b16 %v257
    %v356 = vunpack.c.h.b16 %v257
    %v357 = vunpack.c.l.b16 %v258
    %v358 = vunpack.c.h.b16 %v258
    %v359 = vunpack.c.l.b16 %v259
    %v360 = vunpack.c.h.b16 %v259
    %v361 = vunpack.c.l.b16 %v260
    %v362 = vunpack.c.h.b16 %v260
    %v363 = vunpack.c.l.b16 %v261
    %v364 = vunpack.c.h.b16 %v261
    %v365 = vunpack.c.l.b16 %v262
    %v366 = vunpack.c.h.b16 %v262
    %v367 = vunpack.c.l.b16 %v263
    %v368 = vunpack.c.h.b16 %v263
    %v369 = vpack.c.b16 %v307, %v305
    %v370 = vpack.c.b16 %v308, %v306
    %v371 = vpack.c.b16 %v311, %v309
    %v372 = vpack.c.b16 %v312, %v310
    %v373 = vpack.c.b16 %v315, %v313
    %v374 = vpack.c.b16 %v316, %v314
    %v375 = vpack.c.b16 %v319, %v317
    %v376 = vpack.c.b16 %v320, %v318
    %v377 = vpack.c.b16 %v323, %v321
    %v378 = vpack.c.b16 %v324, %v322
    %v379 = vpack.c.b16 %v327, %v325
    %v380 = vpack.c.b16 %v328, %v326
    %v381 = vpack.c.b16 %v331, %v329
    %v382 = vpack.c.b16 %v332, %v330
    %v383 = vpack.c.b16 %v335, %v333
    %v384 = vpack.c.b16 %v336, %v334
    %v385 = vpack.c.b16 %v339, %v337
    %v386 = vpack.c.b16 %v340, %v338
    %v387 = vpack.c.b16 %v343, %v341
    %v388 = vpack.c.b16 %v344, %v342
    %v389 = vpack.c.b16 %v347, %v345
    %v390 = vpack.c.b16 %v348, %v346
    %v391 = vpack.c.b16 %v351, %v349
    %v392 = vpack.c.b16 %v352, %v350
    %v393 = vpack.c.b16 %v355, %v353
    %v394 = vpack.c.b16 %v356, %v354
    %v395 = vpack.c.b16 %v359, %v357
    %v396 = vpack.c.b16 %v360, %v358
    %v397 = vpack.c.b16 %v363, %v361
    %v398 = vpack.c.b16 %v364, %v362
    %v399 = vpack.c.b16 %v367, %v365
    %v400 = vpack.c.b16 %v368, %v366
    %433 = vmatpush.bf16.msra.mxu0 %v383
    %434 = vmatpush.bf16.msra.mxu0 %v381
    %435 = vmatpush.bf16.msra.mxu0 %v379
    %436 = vmatpush.bf16.msra.mxu0 %v377
    %437 = vmatpush.bf16.msra.mxu0 %v375
    %438 = vmatpush.bf16.msra.mxu0 %v373
    %439 = vmatpush.bf16.msra.mxu0 %v371
    %440 = vmatpush.bf16.msra.mxu0 %v369
    %441 = vmatmul.bf16.gmra.mxu0 %v230
    %v442 = vpop.f32.mrf.mxu0
    %v443 = vadd.f32 %v271, %v442
    %v444 = vpop.f32.mrf.mxu0
    %445 = vdwg.mxu0
    %446 = vmatpush.bf16.msra.mxu0 %v399
    %447 = vmatpush.bf16.msra.mxu0 %v397
    %448 = vmatpush.bf16.msra.mxu0 %v395
    %449 = vmatpush.bf16.msra.mxu0 %v393
    %450 = vmatpush.bf16.msra.mxu0 %v391
    %451 = vmatpush.bf16.msra.mxu0 %v389
    %452 = vmatpush.bf16.msra.mxu0 %v387
    %453 = vmatpush.bf16.msra.mxu0 %v385
    %454 = vmatmul.bf16.gmra.mxu0 %v231
    %v455 = vpop.f32.mrf.mxu0
    %v456 = vadd.f32 %v443, %v455
    %v457 = vpop.f32.mrf.mxu0
    %458 = vdwg.mxu0
    %459 = vmatpush.bf16.msra.mxu0 %v384
    %460 = vmatpush.bf16.msra.mxu0 %v382
    %461 = vmatpush.bf16.msra.mxu0 %v380
    %462 = vmatpush.bf16.msra.mxu0 %v378
    %463 = vmatpush.bf16.msra.mxu0 %v376
    %464 = vmatpush.bf16.msra.mxu0 %v374
    %465 = vmatpush.bf16.msra.mxu0 %v372
    %466 = vmatpush.bf16.msra.mxu0 %v370
    %467 = vmatmul.bf16.gmra.mxu0 %v230
    %v468 = vpop.f32.mrf.mxu0
    %v469 = vadd.f32 %v272, %v468
    %v470 = vpop.f32.mrf.mxu0
    %471 = vdwg.mxu0
    %472 = vmatpush.bf16.msra.mxu0 %v400
    %473 = vmatpush.bf16.msra.mxu0 %v398
    %474 = vmatpush.bf16.msra.mxu0 %v396
    %475 = vmatpush.bf16.msra.mxu0 %v394
    %476 = vmatpush.bf16.msra.mxu0 %v392
    %477 = vmatpush.bf16.msra.mxu0 %v390
    %478 = vmatpush.bf16.msra.mxu0 %v388
    %479 = vmatpush.bf16.msra.mxu0 %v386
    %480 = vmatmul.bf16.gmra.mxu0 %v231
    %v481 = vpop.f32.mrf.mxu0
    %v482 = vadd.f32 %v469, %v481
    %v483 = vpop.f32.mrf.mxu0
    %484 = vdwg.mxu0
    %v485 = vpack.c.bf16 %v482, %v456
    %486 = vst [vmem:[#allocation10] sm:$0xff] %v485
    // Predicated region
    $region38: #{tpu_custom_call.1} parent=1 // pred_check
      _
    $region39: #{tpu_custom_call.1} parent=1 // pred_check_branch
      %488 = sbr.rel (0) target = $region41
    $region40: #{tpu_custom_call.1} parent=1 // pred_region
      %490 = vsyncadd [#allocation4], 0
      %s492 = sshll.u32 [#allocation10], 4
      %s493 = int_to_ptr.vmem [resolvable:$true] %s492
      %s494 = sshll.u32 %s5, 4
      %s495 = int_to_ptr.hbm [resolvable:$true] %s494
      %497 = dma.vmem_to_hbm [thread:$0]  %s493, 128, %s495, [#allocation4]
    $region41: #{tpu_custom_call.1} parent=1 // pred_fallthru
      _
    // Predicated region
    $region42: #{tpu_custom_call.1} parent=1 // pred_check
      _
    $region43: #{tpu_custom_call.1} parent=1 // pred_check_branch
      %499 = sbr.rel (0) target = $region45
    $region44: #{tpu_custom_call.1} parent=1 // pred_region
      %501 = dma.done [#allocation4], 128
    $region45: #{tpu_custom_call.1} parent=1 // pred_fallthru
      _
    %502 = vsyncpa [#allocation3], 1
    %503 = vsyncpa [#allocation6], 1
    %504 = vsyncpa [#allocation9], 1
    %505 = vsyncpa [#allocation4], 1

</llo_original>
